<compile_context>
chip_gen: v5e
topology: v5e:2x2
jax: 0.10.0
libtpu: 0.0.40
codegen_flags: <defaults>
</compile_context>

<pallas_src>
import math

import jax
import jax.numpy as jnp
from jax.experimental import pallas as pl
from jax.experimental.pallas import tpu as pltpu


def _round_up(x, m):
    return ((x + m - 1) // m) * m


def _rbfn_kernel(scal_ref, x_ref, z_ref, nz2_ref, beta_ref, out_ref):
    # scal_ref: SMEM (2,)            -> [alpha, gamma]
    # x_ref:    VMEM (row_tile, dpad)   batch tile (native or bf16 operand dtype)
    # z_ref:    VMEM (dpad, cpad)       centroids, resident across the grid
    # nz2_ref:  VMEM (1, cpad)          precomputed -gamma * ||z_c||^2
    # beta_ref: VMEM (cpad, 1)          centroid weights (0 for padded centroids)
    # out_ref:  VMEM (row_tile, 1)      per-row prediction
    alpha = scal_ref[0]
    gamma = scal_ref[1]

    x = x_ref[...]
    # MXU: B = X @ Z (bf16 or f32 operands, f32 accumulation).
    b = jnp.dot(x, z_ref[...], preferred_element_type=jnp.float32)     # (TN, C)

    # ||x||^2 per row, element-wise path kept in f32 (v5e has no bf16 VPU/EUP).
    xf = x.astype(jnp.float32)
    x2 = jnp.sum(xf * xf, axis=1, keepdims=True)                        # (TN, 1)

    # Fused: A = exp(-gamma * D) = exp(2*gamma*B - gamma*||x||^2 - gamma*||z||^2)
    a = jnp.exp((2.0 * gamma) * b - gamma * x2 + nz2_ref[...])          # (TN, C)

    # torch.mv(A, beta) as an MXU matvec; padded centroids contribute 0.
    pred = alpha + jnp.dot(a, beta_ref[...], preferred_element_type=jnp.float32)
    out_ref[...] = pred.astype(out_ref.dtype)


def rbfn_forward(x, z, beta, alpha, log_gamma, *, operand_dtype=None,
                 max_block_rows=512):
    """RBFN forward.

    x: (N, num_inputs); z: (num_inputs, C); beta: (C,); alpha/log_gamma: scalars.
    operand_dtype: dtype fed to the MXU (e.g. jnp.bfloat16 to halve X/Z HBM
      traffic and double MXU throughput). Element-wise math stays float32.
    """
    n, d = x.shape
    d_z, c = z.shape
    assert d_z == d, "z must be (num_inputs, num_centroids)"

    if operand_dtype is None:
        operand_dtype = x.dtype
    op_itemsize = jnp.dtype(operand_dtype).itemsize

    # Pad feature dim for sublane packing and centroid dim to full 128 lanes.
    dpad = _round_up(d, 16)
    cpad = _round_up(c, 128)

    # Batch tile: large enough to amortize per-grid-step overhead, small enough
    # that the (rows, cpad) f32 intermediates stay well inside scoped VMEM
    # (sized conservatively for v7x's 64 MiB).
    n_pad8 = _round_up(n, 8)
    row_cap = max(8, min(max_block_rows, ((512 * 1024) // max(cpad, 1)) // 8 * 8))
    row_tile = min(row_cap, n_pad8)
    n_pad = _round_up(n, row_tile)
    grid = (n_pad // row_tile,)

    alpha_s = jnp.asarray(alpha, jnp.float32).reshape(())
    gamma = jnp.exp(jnp.asarray(log_gamma, jnp.float32).reshape(()))
    scalars = jnp.stack([alpha_s, gamma])

    # Zero-padded operands (exact: padded features are 0, padded beta is 0).
    x_p = jnp.pad(x, ((0, n_pad - n), (0, dpad - d))).astype(operand_dtype)
    z_p = jnp.pad(z, ((0, dpad - d), (0, cpad - c))).astype(operand_dtype)
    beta_p = jnp.pad(beta.astype(jnp.float32), (0, cpad - c)).reshape(cpad, 1)

    # -gamma * ||z_c||^2, computed from the (possibly quantized) operands the
    # MXU actually sees, hoisted out of the kernel (loop invariant).
    z_f32 = z_p.astype(jnp.float32)
    nz2 = (-gamma) * jnp.sum(z_f32 * z_f32, axis=0, keepdims=True)       # (1, cpad)

    # VMEM budget: double-buffered X tiles + resident Z + live f32 temporaries.
    vmem_bytes = (
        2 * row_tile * dpad * op_itemsize      # X tiles (double buffered)
        + 2 * dpad * cpad * op_itemsize        # Z (resident)
        + 4 * cpad * 4                         # nz2 + beta
        + 2 * row_tile * 4                     # output tiles
        + 6 * row_tile * cpad * 4              # b / a / exp temporaries
    )
    vmem_limit = int(min(64 * 1024 * 1024, max(32 * 1024 * 1024, 2 * vmem_bytes)))

    out = pl.pallas_call(
        _rbfn_kernel,
        out_shape=jax.ShapeDtypeStruct((n_pad, 1), jnp.float32),
        grid=grid,
        in_specs=[
            pl.BlockSpec(memory_space=pltpu.MemorySpace.SMEM),   # [alpha, gamma]
            pl.BlockSpec((row_tile, dpad), lambda i: (i, 0)),    # X batch tile
            pl.BlockSpec((dpad, cpad), lambda i: (0, 0)),        # Z (resident)
            pl.BlockSpec((1, cpad), lambda i: (0, 0)),           # -gamma*||z||^2
            pl.BlockSpec((cpad, 1), lambda i: (0, 0)),           # beta column
        ],
        out_specs=pl.BlockSpec((row_tile, 1), lambda i: (i, 0)),
        compiler_params=pltpu.CompilerParams(
            dimension_semantics=("parallel",),   # v7x: shard batch tiles over both TCs
            vmem_limit_bytes=vmem_limit,
        ),
    )(scalars, x_p, z_p, nz2, beta_p)
    # TODO(synk): for very large num_centroids (> ~2048) add a trailing
    # "arbitrary" grid axis over C with a VMEM scratch accumulator.
    return out[:n, 0]


def init_rbfn_params(key, num_inputs, num_centroids):
    """Deterministic init mirroring RBFN.initialize() (uniform distributions)."""
    k_alpha, k_gamma, k_beta, k_z = jax.random.split(key, 4)
    alpha = jax.random.uniform(k_alpha, (), jnp.float32, -2.0, 2.0)
    lg_lo = -0.1 - math.log(num_inputs)
    lg_hi = 0.1 - math.log(num_inputs)
    log_gamma = jax.random.uniform(k_gamma, (), jnp.float32, lg_lo, lg_hi)
    beta = jax.random.uniform(k_beta, (num_centroids,), jnp.float32, -2.0, 2.0)
    z = jax.random.uniform(k_z, (num_inputs, num_centroids), jnp.float32, -2.0, 2.0)
    return alpha, log_gamma, beta, z


def rbfn_reference(x, z, beta, alpha, log_gamma):
    b = x @ z
    d = (jnp.sum(x * x, axis=1, keepdims=True)
         + jnp.sum(z * z, axis=0)[None, :] - 2.0 * b)
    gamma = jnp.exp(log_gamma)
    a = jnp.exp(-gamma * d)
    return alpha + a @ beta


if __name__ == "__main__":
    key = jax.random.PRNGKey(0)
    k_params, k_x, k_big = jax.random.split(key, 3)

    # --- small config (single tile) -----------------------------------------
    num_inputs, num_centroids, batch = 16, 32, 8
    alpha, log_gamma, beta, z = init_rbfn_params(k_params, num_inputs, num_centroids)
    x = jax.random.normal(k_x, (batch, num_inputs), jnp.float32)

    pred = jax.block_until_ready(rbfn_forward(x, z, beta, alpha, log_gamma))
    ref = rbfn_reference(x, z, beta, alpha, log_gamma)
    assert pred.shape == (batch,)
    assert jnp.allclose(pred, ref, atol=1e-4, rtol=1e-4), (pred, ref)

    # --- larger config: multiple batch tiles + centroid/feature padding -----
    num_inputs2, num_centroids2, batch2 = 20, 200, 1000
    k_p2, k_x2 = jax.random.split(k_big)
    alpha2, log_gamma2, beta2, z2 = init_rbfn_params(k_p2, num_inputs2, num_centroids2)
    x2 = jax.random.normal(k_x2, (batch2, num_inputs2), jnp.float32)

    pred2 = jax.block_until_ready(rbfn_forward(x2, z2, beta2, alpha2, log_gamma2))
    ref2 = rbfn_reference(x2, z2, beta2, alpha2, log_gamma2)
    assert pred2.shape == (batch2,)
    assert jnp.allclose(pred2, ref2, atol=1e-4, rtol=1e-4), \
        float(jnp.max(jnp.abs(pred2 - ref2)))

    # --- bf16 MXU-operand path (element-wise math stays f32) ----------------
    pred_bf16 = jax.block_until_ready(
        rbfn_forward(x2, z2, beta2, alpha2, log_gamma2, operand_dtype=jnp.bfloat16))
    xq = x2.astype(jnp.bfloat16).astype(jnp.float32)
    zq = z2.astype(jnp.bfloat16).astype(jnp.float32)
    ref_bf16 = rbfn_reference(xq, zq, beta2, alpha2, log_gamma2)
    assert jnp.allclose(pred_bf16, ref_bf16, atol=1e-2, rtol=1e-2), \
        float(jnp.max(jnp.abs(pred_bf16 - ref_bf16)))

    print("KERNEL_OK")
</pallas_src>

<mosaic_0001>
module attributes {stable_mosaic.version = 11 : i64} {
  func.func @_rbfn_kernel(%arg0: i32, %arg1: memref<2xf32, #tpu.memory_space<smem>>, %arg2: memref<8x16xf32, #tpu.memory_space<vmem>>, %arg3: memref<16x128xf32, #tpu.memory_space<vmem>>, %arg4: memref<1x128xf32, #tpu.memory_space<vmem>>, %arg5: memref<128x1xf32, #tpu.memory_space<vmem>>, %arg6: memref<8x1xf32, #tpu.memory_space<vmem>>) attributes {dimension_semantics = [#tpu.dimension_semantics<parallel>], iteration_bounds = array<i64: 1>, scalar_prefetch = 0 : i64, scratch_operands = 0 : i64, tpu.core_type = #tpu.core_type<tc>, window_params = [{transform_indices = @transform_0, window_bounds = array<i64: 2>}, {transform_indices = @transform_1, window_bounds = array<i64: 8, 16>}, {pipeline_mode = #tpu.pipeline_mode<synchronous>, transform_indices = @transform_2, window_bounds = array<i64: 16, 128>}, {pipeline_mode = #tpu.pipeline_mode<synchronous>, transform_indices = @transform_3, window_bounds = array<i64: 1, 128>}, {pipeline_mode = #tpu.pipeline_mode<synchronous>, transform_indices = @transform_4, window_bounds = array<i64: 128, 1>}, {transform_indices = @transform_5, window_bounds = array<i64: 8, 1>}]} {
    %c0 = arith.constant 0 : index
    %0 = memref.load %arg1[%c0] : memref<2xf32, #tpu.memory_space<smem>>
    %c1 = arith.constant 1 : index
    %1 = memref.load %arg1[%c1] : memref<2xf32, #tpu.memory_space<smem>>
    %c0_0 = arith.constant 0 : index
    %c0_1 = arith.constant 0 : index
    %2 = vector.load %arg2[%c0_0, %c0_1] : memref<8x16xf32, #tpu.memory_space<vmem>>, vector<8x16xf32>
    %c0_2 = arith.constant 0 : index
    %c0_3 = arith.constant 0 : index
    %3 = vector.load %arg3[%c0_2, %c0_3] : memref<16x128xf32, #tpu.memory_space<vmem>>, vector<16x128xf32>
    %cst = arith.constant dense<0.000000e+00> : vector<8x128xf32>
    %4 = tpu.matmul %2, %3, %cst {dimension_numbers = #tpu.dot_dimension_numbers<[1], [0], [0], [1], [0, 0, 1, 1], [], []>} : vector<8x16xf32>, vector<16x128xf32>, vector<8x128xf32> -> vector<8x128xf32>
    %5 = arith.mulf %2, %2 : vector<8x16xf32>
    %cst_4 = arith.constant dense<0.000000e+00> : vector<8xf32>
    %6 = vector.multi_reduction <add>, %5, %cst_4 [1] : vector<8x16xf32> to vector<8xf32>
    %7 = vector.shape_cast %6 : vector<8xf32> to vector<8x1xf32>
    %cst_5 = arith.constant 2.000000e+00 : f32
    %8 = arith.mulf %cst_5, %1 : f32
    %9 = vector.broadcast %8 : f32 to vector<8x128xf32>
    %10 = arith.mulf %9, %4 : vector<8x128xf32>
    %11 = vector.broadcast %1 : f32 to vector<8x1xf32>
    %12 = arith.mulf %11, %7 : vector<8x1xf32>
    %13 = vector.broadcast %12 : vector<8x1xf32> to vector<8x128xf32>
    %14 = arith.subf %10, %13 : vector<8x128xf32>
    %c0_6 = arith.constant 0 : index
    %c0_7 = arith.constant 0 : index
    %15 = vector.load %arg4[%c0_6, %c0_7] : memref<1x128xf32, #tpu.memory_space<vmem>>, vector<1x128xf32>
    %16 = vector.broadcast %15 : vector<1x128xf32> to vector<8x128xf32>
    %17 = arith.addf %14, %16 : vector<8x128xf32>
    %18 = math.exp %17 : vector<8x128xf32>
    %c0_8 = arith.constant 0 : index
    %c0_9 = arith.constant 0 : index
    %19 = vector.load %arg5[%c0_8, %c0_9] : memref<128x1xf32, #tpu.memory_space<vmem>>, vector<128x1xf32>
    %cst_10 = arith.constant dense<0.000000e+00> : vector<8x1xf32>
    %20 = tpu.matmul %18, %19, %cst_10 {dimension_numbers = #tpu.dot_dimension_numbers<[1], [0], [0], [1], [0, 0, 1, 1], [], []>} : vector<8x128xf32>, vector<128x1xf32>, vector<8x1xf32> -> vector<8x1xf32>
    %21 = vector.broadcast %0 : f32 to vector<8x1xf32>
    %22 = arith.addf %21, %20 : vector<8x1xf32>
    %c0_11 = arith.constant 0 : index
    %c0_12 = arith.constant 0 : index
    %23 = vector.load %arg6[%c0_11, %c0_12] : memref<8x1xf32, #tpu.memory_space<vmem>>, vector<8x1xf32>
    tpu.vector_store %arg6[%c0_11, %c0_12], %22 {strides = array<i32>} : memref<8x1xf32, #tpu.memory_space<vmem>>, vector<8x1xf32>,
    return
  }
  func.func @transform_0(%arg0: i32) -> i32 {
    %c0_i32 = arith.constant 0 : i32
    %c0_i32_0 = arith.constant 0 : i32
    return %c0_i32 : i32
  }
  func.func @transform_1(%arg0: i32) -> (i32, i32) {
    %c0_i32 = arith.constant 0 : i32
    %c0_i32_0 = arith.constant 0 : i32
    return %arg0, %c0_i32 : i32, i32
  }
  func.func @transform_2(%arg0: i32) -> (i32, i32) {
    %c0_i32 = arith.constant 0 : i32
    %c0_i32_0 = arith.constant 0 : i32
    %c0_i32_1 = arith.constant 0 : i32
    return %c0_i32, %c0_i32_0 : i32, i32
  }
  func.func @transform_3(%arg0: i32) -> (i32, i32) {
    %c0_i32 = arith.constant 0 : i32
    %c0_i32_0 = arith.constant 0 : i32
    %c0_i32_1 = arith.constant 0 : i32
    return %c0_i32, %c0_i32_0 : i32, i32
  }
  func.func @transform_4(%arg0: i32) -> (i32, i32) {
    %c0_i32 = arith.constant 0 : i32
    %c0_i32_0 = arith.constant 0 : i32
    %c0_i32_1 = arith.constant 0 : i32
    return %c0_i32, %c0_i32_0 : i32, i32
  }
  func.func @transform_5(%arg0: i32) -> (i32, i32) {
    %c0_i32 = arith.constant 0 : i32
    %c0_i32_0 = arith.constant 0 : i32
    return %arg0, %c0_i32 : i32, i32
  }
}

</mosaic_0001>

<llo_original>
// kernel: tpu_custom_call.1
$region0: #{tpu_custom_call.1}
  #allocation0 [shape = 'u32[]', space=smem, size = 0x4, offset = 0x4, fixed_abs, tag = 'smem constant byte address 0x4 - core index']
  #allocation1 [shape = 'u32[72,128]{1,0:T(1,128)}', space=vmem, size = 0x9000, scoped, tag = 'internal scratch']
  %s0 = inlined_call_operand.vmem [shape: f32[2], index: 0, kind: input, shape index: {}]
  %s1 = inlined_call_operand.vmem [shape: f32[8,16], index: 1, kind: input, shape index: {}]
  %s2 = inlined_call_operand.vmem [shape: f32[16,128], index: 2, kind: input, shape index: {}]
  %s3 = inlined_call_operand.vmem [shape: f32[1,128], index: 3, kind: input, shape index: {}]
  %s4 = inlined_call_operand.vmem [shape: f32[128,1], index: 4, kind: input, shape index: {}]
  %s5 = inlined_call_operand.vmem [shape: f32[8,1], index: 5, kind: output, shape index: {}]
  %s6 = sld [smem:[#allocation0]]
  $region34: #{tpu_custom_call.1} parent=0
    _
  %s8 = ssub.s32 1, %s6
  %s9 = scalar_select 0, %s8, %s6
  $region1: #{tpu_custom_call.1} parent=0
    #allocation2 [shape = 'u8[512]{0}', space=smem, size = 0x200, scoped, tag = 'input window, operand 0, single buffered']
    #allocation3 [shape = 's32[1]{0}', space=sflag, size = 0x4, scoped, tag = 'scoped memory for tpu_custom_call.1']
    %10 = vsyncpa [#allocation3], 0
    // Predicated region
    $region2: #{tpu_custom_call.1} parent=1 // pred_check
      _
    $region3: #{tpu_custom_call.1} parent=1 // pred_check_branch
      %12 = sbr.rel (0) target = $region5
    $region4: #{tpu_custom_call.1} parent=1 // pred_region
      %14 = vsyncadd [#allocation3], 0
      %s16 = sshll.u32 %s0, 4
      %s17 = int_to_ptr.vmem [resolvable:$true] %s16
      %19 = dma.vmem_to_smem %s17, 16, [#allocation2], [#allocation3]
    $region5: #{tpu_custom_call.1} parent=1 // pred_fallthru
      _
    // Predicated region
    $region6: #{tpu_custom_call.1} parent=1 // pred_check
      _
    $region7: #{tpu_custom_call.1} parent=1 // pred_check_branch
      %21 = sbr.rel (0) target = $region9
    $region8: #{tpu_custom_call.1} parent=1 // pred_region
      _
    $region9: #{tpu_custom_call.1} parent=1 // pred_fallthru
      _
    // Predicated region
    $region10: #{tpu_custom_call.1} parent=1 // pred_check
      _
    $region11: #{tpu_custom_call.1} parent=1 // pred_check_branch
      %23 = sbr.rel (0) target = $region13
    $region12: #{tpu_custom_call.1} parent=1 // pred_region
      _
    $region13: #{tpu_custom_call.1} parent=1 // pred_fallthru
      _
    // Predicated region
    $region14: #{tpu_custom_call.1} parent=1 // pred_check
      _
    $region15: #{tpu_custom_call.1} parent=1 // pred_check_branch
      %25 = sbr.rel (0) target = $region17
    $region16: #{tpu_custom_call.1} parent=1 // pred_region
      _
    $region17: #{tpu_custom_call.1} parent=1 // pred_fallthru
      _
    // Predicated region
    $region18: #{tpu_custom_call.1} parent=1 // pred_check
      _
    $region19: #{tpu_custom_call.1} parent=1 // pred_check_branch
      %27 = sbr.rel (0) target = $region21
    $region20: #{tpu_custom_call.1} parent=1 // pred_region
      _
    $region21: #{tpu_custom_call.1} parent=1 // pred_fallthru
      _
    // Predicated region
    $region22: #{tpu_custom_call.1} parent=1 // pred_check
      _
    $region23: #{tpu_custom_call.1} parent=1 // pred_check_branch
      %29 = sbr.rel (0) target = $region25
    $region24: #{tpu_custom_call.1} parent=1 // pred_region
      %31 = dma.done [#allocation3], 16
    $region25: #{tpu_custom_call.1} parent=1 // pred_fallthru
      _
    %32 = sfence
    %s33 = sld [smem:[#allocation2]]
    %s34 = sld [smem:[#allocation2 + $0x1]]
    %v35 = vld [vmem:[%s1] sm:$0xff]
    %v36 = vld [vmem:[%s2] sm:$0xff]
    %v37 = vld [vmem:[%s2 + $0x8] sm:$0xff]
    %vm38 = vcmask 130048
    %v40 = vsel %vm38, %v35, 0
    %42 = vmatpush.msra.mxu0 0.0
    %43 = vmatpush.msra.mxu0 0.0
    %44 = vmatpush.msra.mxu0 0.0
    %45 = vmatpush.msra.mxu0 0.0
    %46 = vmatpush.msra.mxu0 0.0
    %47 = vmatpush.msra.mxu0 0.0
    %48 = vmatpush.msra.mxu0 0.0
    %49 = vmatpush.msra.mxu0 0.0
    %50 = vmatpush.msra.mxu0 0.0
    %51 = vmatpush.msra.mxu0 0.0
    %52 = vmatpush.msra.mxu0 0.0
    %53 = vmatpush.msra.mxu0 0.0
    %54 = vmatpush.msra.mxu0 0.0
    %55 = vmatpush.msra.mxu0 0.0
    %56 = vmatpush.msra.mxu0 %v37
    %57 = vmatpush.msra.mxu0 %v36
    %58 = vmatmul.f32.gmra.mxu0 %v40
    %v59 = vpop.f32.mrf.mxu0
    %v60 = vadd.f32 0.0, %v59
    %61 = vdwg.mxu0
    %v62 = vmul.f32 %v35, %v35
    %v63 = vsel %vm38, %v62, 0.0
    %64 = vadd.xlane.f32.xlu0 %v63
    %v65 = vpop.xlane.xlu0 %64
    %s66 = smul.f32 %s34, 2.0
    %v67 = vstv %s66
    %v68 = vmul.f32 %v67, %v60
    %v69 = vstv %s34
    %v70 = vmul.f32 %v69, %v65
    %v71 = vsub.f32 %v68, %v70
    %v72 = vld [vmem:[%s3] sm:$0x1]
    %v74 = vperm.slane %v72, 0
    %v76 = vadd.f32 %v71, %v74
    %v77 = vmul.f32 %v76, 1.442695
    %v78 = vpow.pop %v77
    %v79 = vld [vmem:[%s4] sm:$0xff]
    %v80 = vld [vmem:[%s4 + $0x8] sm:$0xff]
    %v81 = vld [vmem:[%s4 + $0x10] sm:$0xff]
    %v82 = vld [vmem:[%s4 + $0x18] sm:$0xff]
    %v83 = vld [vmem:[%s4 + $0x20] sm:$0xff]
    %v84 = vld [vmem:[%s4 + $0x28] sm:$0xff]
    %v85 = vld [vmem:[%s4 + $0x30] sm:$0xff]
    %v86 = vld [vmem:[%s4 + $0x38] sm:$0xff]
    %v87 = vld [vmem:[%s4 + $0x40] sm:$0xff]
    %v88 = vld [vmem:[%s4 + $0x48] sm:$0xff]
    %v89 = vld [vmem:[%s4 + $0x50] sm:$0xff]
    %v90 = vld [vmem:[%s4 + $0x58] sm:$0xff]
    %v91 = vld [vmem:[%s4 + $0x60] sm:$0xff]
    %v92 = vld [vmem:[%s4 + $0x68] sm:$0xff]
    %v93 = vld [vmem:[%s4 + $0x70] sm:$0xff]
    %v94 = vld [vmem:[%s4 + $0x78] sm:$0xff]
    %95 = vmatpush.msra.mxu0 %v94
    %96 = vmatpush.msra.mxu0 %v93
    %97 = vmatpush.msra.mxu0 %v92
    %98 = vmatpush.msra.mxu0 %v91
    %99 = vmatpush.msra.mxu0 %v90
    %100 = vmatpush.msra.mxu0 %v89
    %101 = vmatpush.msra.mxu0 %v88
    %102 = vmatpush.msra.mxu0 %v87
    %103 = vmatpush.msra.mxu0 %v86
    %104 = vmatpush.msra.mxu0 %v85
    %105 = vmatpush.msra.mxu0 %v84
    %106 = vmatpush.msra.mxu0 %v83
    %107 = vmatpush.msra.mxu0 %v82
    %108 = vmatpush.msra.mxu0 %v81
    %109 = vmatpush.msra.mxu0 %v80
    %110 = vmatpush.msra.mxu0 %v79
    %111 = vmatmul.f32.gmra.mxu0 %v78
    %v112 = vpop.f32.mrf.mxu0
    %v113 = vadd.f32 0.0, %v112
    %114 = vdwg.mxu0
    %v115 = vstv %s33
    %v116 = vadd.f32 %v115, %v113
    %vm117 = vcmask 7168
    %118 = vst.msk [vmem:[%s5] sm:$0xff] %vm117, %v116
    // Predicated region
    $region26: #{tpu_custom_call.1} parent=1 // pred_check
      _
    $region27: #{tpu_custom_call.1} parent=1 // pred_check_branch
      %120 = sbr.rel (0) target = $region29
    $region28: #{tpu_custom_call.1} parent=1 // pred_region
      _
    $region29: #{tpu_custom_call.1} parent=1 // pred_fallthru
      _
    // Predicated region
    $region30: #{tpu_custom_call.1} parent=1 // pred_check
      _
    $region31: #{tpu_custom_call.1} parent=1 // pred_check_branch
      %122 = sbr.rel (0) target = $region33
    $region32: #{tpu_custom_call.1} parent=1 // pred_region
      _
    $region33: #{tpu_custom_call.1} parent=1 // pred_fallthru
      _
    %123 = vsyncpa [#allocation3], 1

</llo_original>
